<compile_context>
chip_gen: v6e
topology: v6e:2x2x1
jax: 0.10.0
libtpu: 0.0.40
codegen_flags: <defaults>
</compile_context>

<pallas_src>
import functools

import jax
import jax.numpy as jnp
import numpy as np
from jax.experimental import pallas as pl
from jax.experimental.pallas import tpu as pltpu

_LANE = 128
# Budget for keeping the (double-buffered) padded label matrix resident in VMEM.
_LABELS_RESIDENT_BUDGET = 16 * 1024 * 1024


# ----------------------------------------------------------------------------
# Kernels: one tiled propagation step  out = adj_t @ labels  (optionally mixed
# with the residual labels for the soft-label branch).
# ----------------------------------------------------------------------------
def _lp_step_kernel(tk, resident, adj_ref, lab_ref, out_ref, acc_ref):
    """out[i] = sum_k adj_t[i, k] @ labels[k]   (hard-label path)."""
    k = pl.program_id(1)

    @pl.when(k == 0)
    def _init():
        acc_ref[...] = jnp.zeros_like(acc_ref)

    adj = adj_ref[...]
    if resident:
        start = pl.multiple_of(k * tk, _LANE)
        lab = lab_ref[pl.ds(start, tk), :]
    else:
        lab = lab_ref[...]
    # Cast the label chunk to the adjacency stream dtype (bf16 fast path),
    # accumulate on the MXU in f32.
    acc_ref[...] += jnp.dot(adj, lab.astype(adj.dtype),
                            preferred_element_type=jnp.float32)

    @pl.when(k == pl.num_programs(1) - 1)
    def _store():
        out_ref[...] = acc_ref[...].astype(out_ref.dtype)


def _lp_soft_step_kernel(alpha, tk, resident,
                         adj_ref, lab_ref, res_ref, out_ref, acc_ref):
    """out[i] = (1-alpha) * (adj_t @ labels)[i] + alpha * labels[i]."""
    k = pl.program_id(1)

    @pl.when(k == 0)
    def _init():
        acc_ref[...] = jnp.zeros_like(acc_ref)

    adj = adj_ref[...]
    if resident:
        start = pl.multiple_of(k * tk, _LANE)
        lab = lab_ref[pl.ds(start, tk), :]
    else:
        lab = lab_ref[...]
    acc_ref[...] += jnp.dot(adj, lab.astype(adj.dtype),
                            preferred_element_type=jnp.float32)

    @pl.when(k == pl.num_programs(1) - 1)
    def _store():
        mixed = ((1.0 - alpha) * acc_ref[...]
                 + alpha * res_ref[...].astype(jnp.float32))
        out_ref[...] = mixed.astype(out_ref.dtype)


# ----------------------------------------------------------------------------
# Tiling / VMEM helpers
# ----------------------------------------------------------------------------
def _round_up(x, m):
    return ((x + m - 1) // m) * m


def _choose_tiling(n):
    """Pick (tm, tk) for a padded [n_pad, n_pad] adjacency (n_pad mult of 256)."""
    n_pad = _round_up(n, 256)
    # Big K tile (amortize per-step overhead), multiple of 256 for MXU cadence.
    tk = next(t for t in (2048, 1024, 512, 256, 128) if n_pad % t == 0)
    # Row tile: as big as possible but keep >= 2 row blocks so the "parallel"
    # grid axis can shard across the two v7x TensorCores.
    tm = None
    for t in (1024, 512, 256, 128):
        if n_pad % t == 0 and n_pad // t >= 2:
            tm = t
            break
    if tm is None:
        tm = min(128, n_pad)
    return tm, tk


def _vmem_limit_bytes(tm, tk, n_pad, c_pad, adj_bytes, lab_bytes, resident, soft):
    adj = 2 * tm * tk * adj_bytes                              # double-buffered adj tile
    lab = 2 * (n_pad if resident else tk) * c_pad * lab_bytes  # labels buffers
    out = 2 * tm * c_pad * 4                                   # output buffers
    acc = tm * c_pad * 4                                       # f32 accumulator
    res = 2 * tm * c_pad * lab_bytes if soft else 0            # residual buffers
    total = adj + lab + out + acc + res + (4 << 20)            # + compiler scratch margin
    # Keep a floor for compiler-internal scratch, cap for v7x's 64 MiB VMEM.
    return int(min(max(total, 32 << 20), 64 << 20))


# ----------------------------------------------------------------------------
# One propagation step as a pallas_call (operates on padded arrays).
# ----------------------------------------------------------------------------
def _lp_call(adj_pad, labels_pad, *, soft_label, tm, tk):
    n_pad, c_pad = labels_pad.shape
    assert adj_pad.shape == (n_pad, n_pad)
    assert n_pad % tm == 0 and n_pad % tk == 0

    grid = (n_pad // tm, n_pad // tk)
    adj_bytes = adj_pad.dtype.itemsize
    lab_bytes = labels_pad.dtype.itemsize
    resident = 2 * n_pad * c_pad * lab_bytes <= _LABELS_RESIDENT_BUDGET
    soft = float(soft_label) != 0.0

    adj_spec = pl.BlockSpec((tm, tk), lambda i, k: (i, k))
    if resident:
        # Whole label matrix fetched once (constant block index), K-sliced in-kernel.
        lab_spec = pl.BlockSpec((n_pad, c_pad), lambda i, k: (0, 0))
    else:
        lab_spec = pl.BlockSpec((tk, c_pad), lambda i, k: (k, 0))
    row_spec = pl.BlockSpec((tm, c_pad), lambda i, k: (i, 0))

    compiler_params = pltpu.CompilerParams(
        dimension_semantics=("parallel", "arbitrary"),
        vmem_limit_bytes=_vmem_limit_bytes(tm, tk, n_pad, c_pad,
                                           adj_bytes, lab_bytes, resident, soft),
    )
    out_shape = jax.ShapeDtypeStruct((n_pad, c_pad), jnp.float32)
    scratch = [pltpu.VMEM((tm, c_pad), jnp.float32)]

    if not soft:
        kernel = functools.partial(_lp_step_kernel, tk, resident)
        grid_spec = pltpu.PrefetchScalarGridSpec(
            num_scalar_prefetch=0,
            grid=grid,
            in_specs=[adj_spec, lab_spec],
            out_specs=row_spec,
            scratch_shapes=scratch,
        )
        return pl.pallas_call(
            kernel,
            out_shape=out_shape,
            grid_spec=grid_spec,
            compiler_params=compiler_params,
        )(adj_pad, labels_pad)

    kernel = functools.partial(_lp_soft_step_kernel, float(soft_label), tk, resident)
    grid_spec = pltpu.PrefetchScalarGridSpec(
        num_scalar_prefetch=0,
        grid=grid,
        in_specs=[adj_spec, lab_spec, row_spec],
        out_specs=row_spec,
        scratch_shapes=scratch,
    )
    return pl.pallas_call(
        kernel,
        out_shape=out_shape,
        grid_spec=grid_spec,
        compiler_params=compiler_params,
    )(adj_pad, labels_pad, labels_pad)


# ----------------------------------------------------------------------------
# Public wrapper (mirrors LPA.forward)
# ----------------------------------------------------------------------------
def lpa_forward(adj_t, labels, n_lpa, soft_label=0.0, *, tm=None, tk=None,
                adj_dtype=jnp.bfloat16):
    """Pallas implementation of LPA.forward (dense-adjacency formulation).

    adj_t : [N, N] dense, destination-major weighted adjacency (adj_t[v, u]).
    labels: [N, C] label matrix.
    adj_dtype: dtype used to stream the adjacency (bf16 default; use
               jnp.float32 for a bit-accurate path).
    """
    n, n2 = adj_t.shape
    assert n == n2
    c = labels.shape[1]
    out_dtype = labels.dtype

    if n_lpa <= 0:
        return labels

    tm_auto, tk_auto = _choose_tiling(n)
    tm = tm if tm is not None else tm_auto
    tk = tk if tk is not None else tk_auto
    n_pad = _round_up(n, max(tm, tk))
    assert n_pad % tm == 0 and n_pad % tk == 0, "tm/tk must divide the padded N"
    c_pad = _round_up(max(c, 1), _LANE)

    # Pad once (zero rows/cols keep the propagation exact: padded nodes have no
    # edges and padded classes stay zero); adjacency streamed as adj_dtype.
    adj_pad = jnp.zeros((n_pad, n_pad), adj_dtype).at[:n, :n].set(
        adj_t.astype(adj_dtype))
    lab_pad = jnp.zeros((n_pad, c_pad), jnp.float32).at[:n, :c].set(
        labels.astype(jnp.float32))

    if float(soft_label) == 0.0:
        for _ in range(n_lpa):
            lab_pad = _lp_call(adj_pad, lab_pad, soft_label=0.0, tm=tm, tk=tk)
    else:
        # Original-module quirk: lp() always consumes the ORIGINAL labels in
        # the soft-label branch, so every iteration yields the same z -> a
        # single fused (1-s)*A@labels + s*labels step reproduces it exactly.
        lab_pad = _lp_call(adj_pad, lab_pad, soft_label=soft_label, tm=tm, tk=tk)

    return lab_pad[:n, :c].astype(out_dtype)


# ----------------------------------------------------------------------------
# Pure reference (numpy float64; mirrors the PyTorch module, quirk included)
# ----------------------------------------------------------------------------
def lpa_reference(adj_t, labels, n_lpa, soft_label=0.0):
    adj_t = np.asarray(adj_t, dtype=np.float64)
    labels = np.asarray(labels, dtype=np.float64)
    if float(soft_label) == 0.0:
        for _ in range(n_lpa):
            labels = adj_t @ labels
        return labels
    z = labels
    for _ in range(n_lpa):
        z = (1.0 - soft_label) * (adj_t @ labels) + soft_label * labels
    return z


# ----------------------------------------------------------------------------
# Demo / self-test
# ----------------------------------------------------------------------------
if __name__ == "__main__":
    N, C = 300, 16          # non-multiple-of-128 N to exercise the padding path
    N_LPA = 3

    root = jax.random.PRNGKey(0)
    k_adj, k_lab = jax.random.split(root, 2)

    # Dense destination-major adjacency with self-loops, row-normalized so the
    # incoming edge weights of every node sum to 1 (classic LPA weighting).
    eye = jnp.eye(N, dtype=jnp.float32)
    mask = jnp.maximum(
        jax.random.bernoulli(k_adj, 0.05, (N, N)).astype(jnp.float32), eye)
    adj_t = mask / jnp.sum(mask, axis=-1, keepdims=True)      # [dst, src]

    # One-hot initial labels.
    y = jax.random.randint(k_lab, (N,), 0, C)
    labels = jax.nn.one_hot(y, C, dtype=jnp.float32)

    fwd = jax.jit(lpa_forward,
                  static_argnames=("n_lpa", "soft_label", "tm", "tk", "adj_dtype"))

    # (1) f32 adjacency, default tiles: tight-precision check.
    out = jax.block_until_ready(
        fwd(adj_t, labels, n_lpa=N_LPA, soft_label=0.0, adj_dtype=jnp.float32))
    np.testing.assert_allclose(np.asarray(out),
                               lpa_reference(adj_t, labels, N_LPA, 0.0),
                               rtol=1e-4, atol=1e-5)

    # (2) bf16 adjacency stream (fast default path), forced multi-tile grid.
    out = jax.block_until_ready(
        fwd(adj_t, labels, n_lpa=N_LPA, soft_label=0.0, tm=128, tk=128))
    np.testing.assert_allclose(np.asarray(out),
                               lpa_reference(adj_t, labels, N_LPA, 0.0),
                               rtol=5e-2, atol=2e-2)

    # (3) soft-label path, bf16 adjacency, default tiles.
    out = jax.block_until_ready(
        fwd(adj_t, labels, n_lpa=N_LPA, soft_label=0.7))
    np.testing.assert_allclose(np.asarray(out),
                               lpa_reference(adj_t, labels, N_LPA, 0.7),
                               rtol=5e-2, atol=2e-2)

    # (4) soft-label path with n_lpa == 0 returns the labels unchanged.
    out = jax.block_until_ready(fwd(adj_t, labels, n_lpa=0, soft_label=0.7))
    np.testing.assert_allclose(np.asarray(out), np.asarray(labels),
                               rtol=0, atol=0)

    print("KERNEL_OK")
</pallas_src>

<mosaic_0001>
module attributes {stable_mosaic.version = 11 : i64} {
  func.func @_lp_step_kernel(%arg0: i32, %arg1: i32, %arg2: memref<256x512xf32, #tpu.memory_space<vmem>>, %arg3: memref<512x128xf32, #tpu.memory_space<vmem>>, %arg4: memref<256x128xf32, #tpu.memory_space<vmem>>, %arg5: memref<256x128xf32, #tpu.memory_space<vmem>>) attributes {dimension_semantics = [#tpu.dimension_semantics<parallel>, #tpu.dimension_semantics<arbitrary>], iteration_bounds = array<i64: 2, 1>, scalar_prefetch = 0 : i64, scratch_operands = 1 : i64, tpu.core_type = #tpu.core_type<tc>, window_params = [{transform_indices = @transform_0, window_bounds = array<i64: 256, 512>}, {pipeline_mode = #tpu.pipeline_mode<synchronous>, transform_indices = @transform_1, window_bounds = array<i64: 512, 128>}, {transform_indices = @transform_2, window_bounds = array<i64: 256, 128>}]} {
    %c0_i32 = arith.constant 0 : i32
    %0 = arith.cmpi eq, %arg1, %c0_i32 : i32
    %1 = arith.extui %0 : i1 to i32
    %c0_i32_0 = arith.constant 0 : i32
    %2 = arith.cmpi ne, %1, %c0_i32_0 : i32
    scf.if %2 {
      %cst_9 = arith.constant 0.000000e+00 : f32
      %15 = vector.broadcast %cst_9 : f32 to vector<256x128xf32>
      %c0_10 = arith.constant 0 : index
      %c0_11 = arith.constant 0 : index
      %16 = vector.load %arg5[%c0_10, %c0_11] : memref<256x128xf32, #tpu.memory_space<vmem>>, vector<256x128xf32>
      tpu.vector_store %arg5[%c0_10, %c0_11], %15 {strides = array<i32>} : memref<256x128xf32, #tpu.memory_space<vmem>>, vector<256x128xf32>,
    } else {
    }
    %c0 = arith.constant 0 : index
    %c0_1 = arith.constant 0 : index
    %3 = vector.load %arg2[%c0, %c0_1] : memref<256x512xf32, #tpu.memory_space<vmem>>, vector<256x512xf32>
    %c512_i32 = arith.constant 512 : i32
    %4 = arith.muli %arg1, %c512_i32 : i32
    %5 = tpu.assume_multiple %4, 128 : i32
    %6 = arith.index_cast %5 : i32 to index
    %c0_2 = arith.constant 0 : index
    %7 = vector.load %arg3[%6, %c0_2] : memref<512x128xf32, #tpu.memory_space<vmem>>, vector<512x128xf32>
    %c0_3 = arith.constant 0 : index
    %c0_4 = arith.constant 0 : index
    %8 = vector.load %arg5[%c0_3, %c0_4] : memref<256x128xf32, #tpu.memory_space<vmem>>, vector<256x128xf32>
    %cst = arith.constant dense<0.000000e+00> : vector<256x128xf32>
    %9 = tpu.matmul %3, %7, %cst {dimension_numbers = #tpu.dot_dimension_numbers<[1], [0], [0], [1], [0, 0, 1, 1], [], []>} : vector<256x512xf32>, vector<512x128xf32>, vector<256x128xf32> -> vector<256x128xf32>
    %10 = arith.addf %8, %9 : vector<256x128xf32>
    %c0_5 = arith.constant 0 : index
    %c0_6 = arith.constant 0 : index
    %11 = vector.load %arg5[%c0_5, %c0_6] : memref<256x128xf32, #tpu.memory_space<vmem>>, vector<256x128xf32>
    tpu.vector_store %arg5[%c0_5, %c0_6], %10 {strides = array<i32>} : memref<256x128xf32, #tpu.memory_space<vmem>>, vector<256x128xf32>,
    %c0_i32_7 = arith.constant 0 : i32
    %12 = arith.cmpi eq, %arg1, %c0_i32_7 : i32
    %13 = arith.extui %12 : i1 to i32
    %c0_i32_8 = arith.constant 0 : i32
    %14 = arith.cmpi ne, %13, %c0_i32_8 : i32
    scf.if %14 {
      %c0_9 = arith.constant 0 : index
      %c0_10 = arith.constant 0 : index
      %15 = vector.load %arg5[%c0_9, %c0_10] : memref<256x128xf32, #tpu.memory_space<vmem>>, vector<256x128xf32>
      %c0_11 = arith.constant 0 : index
      %c0_12 = arith.constant 0 : index
      %16 = vector.load %arg4[%c0_11, %c0_12] : memref<256x128xf32, #tpu.memory_space<vmem>>, vector<256x128xf32>
      tpu.vector_store %arg4[%c0_11, %c0_12], %15 {strides = array<i32>} : memref<256x128xf32, #tpu.memory_space<vmem>>, vector<256x128xf32>,
    } else {
    }
    return
  }
  func.func @transform_0(%arg0: i32, %arg1: i32) -> (i32, i32) {
    %c0_i32 = arith.constant 0 : i32
    return %arg0, %arg1 : i32, i32
  }
  func.func @transform_1(%arg0: i32, %arg1: i32) -> (i32, i32) {
    %c0_i32 = arith.constant 0 : i32
    %c0_i32_0 = arith.constant 0 : i32
    %c0_i32_1 = arith.constant 0 : i32
    return %c0_i32, %c0_i32_0 : i32, i32
  }
  func.func @transform_2(%arg0: i32, %arg1: i32) -> (i32, i32) {
    %c0_i32 = arith.constant 0 : i32
    %c0_i32_0 = arith.constant 0 : i32
    return %arg0, %c0_i32 : i32, i32
  }
}

</mosaic_0001>

<llo_original>
// kernel: lpa_forward.3
$region0: #{lpa_forward.3}
  #allocation0 [shape = 'u32[]', space=smem, size = 0x4, offset = 0x4, fixed_abs, tag = 'smem constant byte address 0x4 - core index']
  #allocation1 [shape = 'u32[144,128]{1,0:T(1,128)}', space=vmem, size = 0x12000, scoped, tag = 'internal scratch']
  #allocation2 [shape = 'f32[256,128]{1,0:T(8,128)}', space=vmem, size = 0x20000, scoped, tag = 'scratch operand']
  %s0 = inlined_call_operand.vmem [shape: f32[512,512], index: 0, kind: input, shape index: {}]
  %s1 = inlined_call_operand.vmem [shape: f32[512,128], index: 1, kind: input, shape index: {}]
  %s2 = inlined_call_operand.vmem [shape: f32[512,128], index: 2, kind: output, shape index: {}]
  %s3 = sld [smem:[#allocation0]]
  $region49: #{lpa_forward.3} parent=0
    _
  %s5 = ssub.s32 1, %s3
  %s6 = scalar_select 0, %s5, %s3
  loop: start=0, step=1, limit=4
  $region2: #{lpa_forward.3} parent=0 // loop_pre_header
    _
  $region3: #{lpa_forward.3} parent=0 // loop_header
    %s8 = sphi 0, %s12
    %p9 = scmp.ge.s32.totalorder %s8, 4
    %s15 = sphi 0, %s27
    %s16 = sphi 0, %s23
    %s17 = sphi 0, %s15
    %s18 = sphi 0, %s16
    %s19 = sphi 0, %s17
    %s20 = sphi 0, %s18
    %s32 = sphi 0, %s34
    %s35 = sphi 0, %s32
    %s36 = sphi 0, %s35
    %s52 = sphi 0, %s36
    %s56 = sphi 0, %s56
    %s58 = sphi 0, %s56
    %s59 = sphi 0, %s58
    %s73 = sphi 0, %s59
    %s79 = sphi 0, %s81
    %s82 = sphi 0, %s79
    %s83 = sphi 0, %s82
    %s99 = sphi 0, %s83
  $region4: #{lpa_forward.3} parent=0 // loop_header_branch
    %11 = sbr.rel (%p9) target = $region8
  $region5: #{lpa_forward.3} parent=0 // loop_body
    %s13 = ssub.s32 %s8, 1
    %s14 = ssub.s32 %s8, 2
    %s21 = sadd.s32 1, %s16
    %p22 = scmp.ge.s32.totalorder %s21, 1
    %s23 = scalar_select %p22, 0, %s21
    %s24 = sadd.s32 1, %s15
    %s25 = scalar_select %p22, %s24, %s15
    %p26 = scmp.ge.s32.totalorder %s25, 2
    %s27 = scalar_select %p26, 0, %s25
    %s28 = ssub.s32 %s15, %s27
    %s29 = ssub.s32 %s16, %s23
    %s30 = sor.u32 %s28, %s29
    %p31 = scmp.eq.s32.totalorder %s30, 0
    %s33 = sadd.s32 %s32, 1
    %s34 = scalar_select %p31, %s32, %s33
    %p37 = pneg %p31
    %p38 = scmp.eq.s32.totalorder %s8, 1
    %p39 = por %p37, %p38
    %p40 = scmp.ne.s32.totalorder %s32, %s35
    %p41 = scmp.eq.s32.totalorder %s8, 0
    %p42 = por %p40, %p41
    %p43 = scmp.ne.s32.totalorder %s32, %s35
    %p44 = scmp.eq.s32.totalorder %s13, 1
    %p45 = por %p43, %p44
    %p46 = scmp.ne.s32.totalorder %s35, %s36
    %p47 = scmp.eq.s32.totalorder %s13, 0
    %p48 = por %p46, %p47
    %p49 = scmp.ne.s32.totalorder %s35, %s36
    %p50 = scmp.eq.s32.totalorder %s14, 1
    %p51 = por %p49, %p50
    %p53 = scmp.ne.s32.totalorder %s36, %s52
    %p54 = scmp.eq.s32.totalorder %s14, 0
    %p55 = por %p53, %p54
    %s57 = sadd.s32 %s56, 1
    %p60 = scmp.eq.s32.totalorder %s8, 1
    %p61 = scmp.ne.s32.totalorder %s56, %s58
    %p62 = scmp.eq.s32.totalorder %s8, 0
    %p63 = por %p61, %p62
    %p64 = scmp.ne.s32.totalorder %s56, %s58
    %p65 = scmp.eq.s32.totalorder %s13, 1
    %p66 = por %p64, %p65
    %p67 = scmp.ne.s32.totalorder %s58, %s59
    %p68 = scmp.eq.s32.totalorder %s13, 0
    %p69 = por %p67, %p68
    %p70 = scmp.ne.s32.totalorder %s58, %s59
    %p71 = scmp.eq.s32.totalorder %s14, 1
    %p72 = por %p70, %p71
    %p74 = scmp.ne.s32.totalorder %s59, %s73
    %p75 = scmp.eq.s32.totalorder %s14, 0
    %p76 = por %p74, %p75
    %s77 = ssub.s32 %s15, %s27
    %p78 = scmp.eq.s32.totalorder %s77, 0
    %s80 = sadd.s32 %s79, 1
    %s81 = scalar_select %p78, %s79, %s80
    %p84 = pneg %p78
    %p85 = scmp.eq.s32.totalorder %s8, 1
    %p86 = por %p84, %p85
    %p87 = scmp.ne.s32.totalorder %s79, %s82
    %p88 = scmp.eq.s32.totalorder %s8, 0
    %p89 = por %p87, %p88
    %p90 = scmp.ne.s32.totalorder %s79, %s82
    %p91 = scmp.eq.s32.totalorder %s13, 1
    %p92 = por %p90, %p91
    %p93 = scmp.ne.s32.totalorder %s82, %s83
    %p94 = scmp.eq.s32.totalorder %s13, 0
    %p95 = por %p93, %p94
    %p96 = scmp.ne.s32.totalorder %s82, %s83
    %p97 = scmp.eq.s32.totalorder %s14, 1
    %p98 = por %p96, %p97
    %p100 = scmp.ne.s32.totalorder %s83, %s99
    %p101 = scmp.eq.s32.totalorder %s14, 0
    %p102 = por %p100, %p101
    %p103 = scmp.le.s32.totalorder 1, %s8
    %p104 = scmp.lt.s32.totalorder %s8, 3
    %p105 = pnand %p103, %p104
    %p106 = pneg %p105
    // Predicated region
    $region9: #{lpa_forward.3} parent=5 // pred_check
      _
    $region10: #{lpa_forward.3} parent=5 // pred_check_branch
      %108 = sbr.rel (%p105) target = $region12
    $region11: #{lpa_forward.3} parent=5 // pred_region
      %s109 = ssub.s32 %s8, 1
      // Predicated region
      $region13: #{lpa_forward.3} parent=11 // pred_check
        %p110 = pneg %p69
      $region14: #{lpa_forward.3} parent=11 // pred_check_branch
        %112 = sbr.rel (%p110) target = $region16
      $region15: #{lpa_forward.3} parent=11 // pred_region
        _
      $region16: #{lpa_forward.3} parent=11 // pred_fallthru
        _
    $region12: #{lpa_forward.3} parent=5 // pred_fallthru
      _
    %p113 = scmp.lt.s32.totalorder %s8, 2
    // Predicated region
    $region17: #{lpa_forward.3} parent=5 // pred_check
      %p114 = pneg %p113
    $region18: #{lpa_forward.3} parent=5 // pred_check_branch
      %116 = sbr.rel (%p114) target = $region20
    $region19: #{lpa_forward.3} parent=5 // pred_region
      // Predicated region
      $region21: #{lpa_forward.3} parent=19 // pred_check
        %p117 = pneg %p42
      $region22: #{lpa_forward.3} parent=19 // pred_check_branch
        %119 = sbr.rel (%p117) target = $region24
      $region23: #{lpa_forward.3} parent=19 // pred_region
        %s120 = smul.u32 32, %s15
        %s121 = smul.u32 4, %s16
        %p122 = scmp.lt.s32.totalorder %s120, 63
        %s123 = scalar_select %p122, %s120, 63
        %p124 = scmp.lt.s32.totalorder %s121, 3
        %s125 = scalar_select %p124, %s121, 3
        %s126 = smul.addr %s123, 4
        %s127 = sadd.s32 %s125, %s126
        %s128 = smul.addr %s127, 8
        %s129 = scalar_lea.vmem %s0, %s128
        %s130 = smul.u32 32, %s15
        %s131 = smul.u32 4, %s16
      $region24: #{lpa_forward.3} parent=19 // pred_fallthru
        _
    $region20: #{lpa_forward.3} parent=5 // pred_fallthru
      _
    %p132 = scmp.le.s32.totalorder 1, %s8
    %p133 = scmp.lt.s32.totalorder %s8, 3
    %p134 = pnand %p132, %p133
    %p135 = pneg %p134
    // Predicated region
    $region25: #{lpa_forward.3} parent=5 // pred_check
      _
    $region26: #{lpa_forward.3} parent=5 // pred_check_branch
      %137 = sbr.rel (%p134) target = $region28
    $region27: #{lpa_forward.3} parent=5 // pred_region
      %s138 = ssub.s32 %s8, 1
      %s139 = smul.u32 32, %s17
      %s140 = smul.u32 4, %s18
      %p141 = scmp.lt.s32.totalorder %s139, 63
      %s142 = scalar_select %p141, %s139, 63
      %p143 = scmp.lt.s32.totalorder %s140, 3
      %s144 = scalar_select %p143, %s140, 3
      %s145 = smul.addr %s142, 4
      %s146 = sadd.s32 %s144, %s145
      %s147 = smul.addr %s146, 8
      %s148 = scalar_lea.vmem %s0, %s147
      %p149 = pneg %p48
      %p150 = pneg %p45
      %p151 = pneg %p69
      %p152 = pneg %p66
      %p153 = pneg %p95
      %p154 = pneg %p92
      %s155 = smul.u32 32, %s17
      %p156 = scmp.lt.s32.totalorder %s155, 63
      %s157 = scalar_select %p156, %s155, 63
      %s158 = smul.addr %s157, 8
      %s159 = scalar_lea.vmem %s2, %s158
      %s160 = smul.u32 32, %s17
      %s161 = smul.u32 4, %s18
      %p162 = scmp.lt.s32.totalorder %s160, 63
      %s163 = scalar_select %p162, %s160, 63
      %p164 = scmp.lt.s32.totalorder %s161, 3
      %s165 = scalar_select %p164, %s161, 3
      %s166 = smul.addr %s163, 4
      %s167 = sadd.s32 %s165, %s166
      %s168 = smul.addr %s167, 8
      %s169 = scalar_lea.vmem %s0, %s168
      %s170 = smul.u32 32, %s17
      %s171 = smul.u32 4, %s18
      %s172 = smul.u32 32, %s17
      %p173 = scmp.lt.s32.totalorder %s172, 63
      %s174 = scalar_select %p173, %s172, 63
      %s175 = smul.addr %s174, 8
      %s176 = scalar_lea.vmem %s2, %s175
      %s177 = smul.u32 32, %s17
      %p178 = scmp.eq.s32.totalorder %s18, 0
      // Predicated region
      $region29: #{lpa_forward.3} parent=27 // pred_check
        %p179 = pneg %p178
      $region30: #{lpa_forward.3} parent=27 // pred_check_branch
        %181 = sbr.rel (%p179) target = $region32
      $region31: #{lpa_forward.3} parent=27 // pred_region
        %182 = vst [vmem:[#allocation2] sm:$0xff] 0.0
        %183 = vst [vmem:[#allocation2 + $0x8] sm:$0xff] 0.0
        %184 = vst [vmem:[#allocation2 + $0x10] sm:$0xff] 0.0
        %185 = vst [vmem:[#allocation2 + $0x18] sm:$0xff] 0.0
        %186 = vst [vmem:[#allocation2 + $0x20] sm:$0xff] 0.0
        %187 = vst [vmem:[#allocation2 + $0x28] sm:$0xff] 0.0
        %188 = vst [vmem:[#allocation2 + $0x30] sm:$0xff] 0.0
        %189 = vst [vmem:[#allocation2 + $0x38] sm:$0xff] 0.0
        %190 = vst [vmem:[#allocation2 + $0x40] sm:$0xff] 0.0
        %191 = vst [vmem:[#allocation2 + $0x48] sm:$0xff] 0.0
        %192 = vst [vmem:[#allocation2 + $0x50] sm:$0xff] 0.0
        %193 = vst [vmem:[#allocation2 + $0x58] sm:$0xff] 0.0
        %194 = vst [vmem:[#allocation2 + $0x60] sm:$0xff] 0.0
        %195 = vst [vmem:[#allocation2 + $0x68] sm:$0xff] 0.0
        %196 = vst [vmem:[#allocation2 + $0x70] sm:$0xff] 0.0
        %197 = vst [vmem:[#allocation2 + $0x78] sm:$0xff] 0.0
        %198 = vst [vmem:[#allocation2 + $0x80] sm:$0xff] 0.0
        %199 = vst [vmem:[#allocation2 + $0x88] sm:$0xff] 0.0
        %200 = vst [vmem:[#allocation2 + $0x90] sm:$0xff] 0.0
        %201 = vst [vmem:[#allocation2 + $0x98] sm:$0xff] 0.0
        %202 = vst [vmem:[#allocation2 + $0xa0] sm:$0xff] 0.0
        %203 = vst [vmem:[#allocation2 + $0xa8] sm:$0xff] 0.0
        %204 = vst [vmem:[#allocation2 + $0xb0] sm:$0xff] 0.0
        %205 = vst [vmem:[#allocation2 + $0xb8] sm:$0xff] 0.0
        %206 = vst [vmem:[#allocation2 + $0xc0] sm:$0xff] 0.0
        %207 = vst [vmem:[#allocation2 + $0xc8] sm:$0xff] 0.0
        %208 = vst [vmem:[#allocation2 + $0xd0] sm:$0xff] 0.0
        %209 = vst [vmem:[#allocation2 + $0xd8] sm:$0xff] 0.0
        %210 = vst [vmem:[#allocation2 + $0xe0] sm:$0xff] 0.0
        %211 = vst [vmem:[#allocation2 + $0xe8] sm:$0xff] 0.0
        %212 = vst [vmem:[#allocation2 + $0xf0] sm:$0xff] 0.0
        %213 = vst [vmem:[#allocation2 + $0xf8] sm:$0xff] 0.0
      $region32: #{lpa_forward.3} parent=27 // pred_fallthru
        _
      %v214 = vld [vmem:[%s169] sm:$0xff]
      %v215 = vld [vmem:[%s169 + $0x8] sm:$0xff]
      %v216 = vld [vmem:[%s169 + $0x10] sm:$0xff]
      %v217 = vld [vmem:[%s169 + $0x18] sm:$0xff]
      %v218 = vld [vmem:[%s169 + $0x20] sm:$0xff]
      %v219 = vld [vmem:[%s169 + $0x28] sm:$0xff]
      %v220 = vld [vmem:[%s169 + $0x30] sm:$0xff]
      %v221 = vld [vmem:[%s169 + $0x38] sm:$0xff]
      %v222 = vld [vmem:[%s169 + $0x40] sm:$0xff]
      %v223 = vld [vmem:[%s169 + $0x48] sm:$0xff]
      %v224 = vld [vmem:[%s169 + $0x50] sm:$0xff]
      %v225 = vld [vmem:[%s169 + $0x58] sm:$0xff]
      %v226 = vld [vmem:[%s169 + $0x60] sm:$0xff]
      %v227 = vld [vmem:[%s169 + $0x68] sm:$0xff]
      %v228 = vld [vmem:[%s169 + $0x70] sm:$0xff]
      %v229 = vld [vmem:[%s169 + $0x78] sm:$0xff]
      %v230 = vld [vmem:[%s169 + $0x80] sm:$0xff]
      %v231 = vld [vmem:[%s169 + $0x88] sm:$0xff]
      %v232 = vld [vmem:[%s169 + $0x90] sm:$0xff]
      %v233 = vld [vmem:[%s169 + $0x98] sm:$0xff]
      %v234 = vld [vmem:[%s169 + $0xa0] sm:$0xff]
      %v235 = vld [vmem:[%s169 + $0xa8] sm:$0xff]
      %v236 = vld [vmem:[%s169 + $0xb0] sm:$0xff]
      %v237 = vld [vmem:[%s169 + $0xb8] sm:$0xff]
      %v238 = vld [vmem:[%s169 + $0xc0] sm:$0xff]
      %v239 = vld [vmem:[%s169 + $0xc8] sm:$0xff]
      %v240 = vld [vmem:[%s169 + $0xd0] sm:$0xff]
      %v241 = vld [vmem:[%s169 + $0xd8] sm:$0xff]
      %v242 = vld [vmem:[%s169 + $0xe0] sm:$0xff]
      %v243 = vld [vmem:[%s169 + $0xe8] sm:$0xff]
      %v244 = vld [vmem:[%s169 + $0xf0] sm:$0xff]
      %v245 = vld [vmem:[%s169 + $0xf8] sm:$0xff]
      %v246 = vld [vmem:[%s169 + $0x100] sm:$0xff]
      %v247 = vld [vmem:[%s169 + $0x108] sm:$0xff]
      %v248 = vld [vmem:[%s169 + $0x110] sm:$0xff]
      %v249 = vld [vmem:[%s169 + $0x118] sm:$0xff]
      %v250 = vld [vmem:[%s169 + $0x120] sm:$0xff]
      %v251 = vld [vmem:[%s169 + $0x128] sm:$0xff]
      %v252 = vld [vmem:[%s169 + $0x130] sm:$0xff]
      %v253 = vld [vmem:[%s169 + $0x138] sm:$0xff]
      %v254 = vld [vmem:[%s169 + $0x140] sm:$0xff]
      %v255 = vld [vmem:[%s169 + $0x148] sm:$0xff]
      %v256 = vld [vmem:[%s169 + $0x150] sm:$0xff]
      %v257 = vld [vmem:[%s169 + $0x158] sm:$0xff]
      %v258 = vld [vmem:[%s169 + $0x160] sm:$0xff]
      %v259 = vld [vmem:[%s169 + $0x168] sm:$0xff]
      %v260 = vld [vmem:[%s169 + $0x170] sm:$0xff]
      %v261 = vld [vmem:[%s169 + $0x178] sm:$0xff]
      %v262 = vld [vmem:[%s169 + $0x180] sm:$0xff]
      %v263 = vld [vmem:[%s169 + $0x188] sm:$0xff]
      %v264 = vld [vmem:[%s169 + $0x190] sm:$0xff]
      %v265 = vld [vmem:[%s169 + $0x198] sm:$0xff]
      %v266 = vld [vmem:[%s169 + $0x1a0] sm:$0xff]
      %v267 = vld [vmem:[%s169 + $0x1a8] sm:$0xff]
      %v268 = vld [vmem:[%s169 + $0x1b0] sm:$0xff]
      %v269 = vld [vmem:[%s169 + $0x1b8] sm:$0xff]
      %v270 = vld [vmem:[%s169 + $0x1c0] sm:$0xff]
      %v271 = vld [vmem:[%s169 + $0x1c8] sm:$0xff]
      %v272 = vld [vmem:[%s169 + $0x1d0] sm:$0xff]
      %v273 = vld [vmem:[%s169 + $0x1d8] sm:$0xff]
      %v274 = vld [vmem:[%s169 + $0x1e0] sm:$0xff]
      %v275 = vld [vmem:[%s169 + $0x1e8] sm:$0xff]
      %v276 = vld [vmem:[%s169 + $0x1f0] sm:$0xff]
      %v277 = vld [vmem:[%s169 + $0x1f8] sm:$0xff]
      %v278 = vld [vmem:[%s169 + $0x200] sm:$0xff]
      %v279 = vld [vmem:[%s169 + $0x208] sm:$0xff]
      %v280 = vld [vmem:[%s169 + $0x210] sm:$0xff]
      %v281 = vld [vmem:[%s169 + $0x218] sm:$0xff]
      %v282 = vld [vmem:[%s169 + $0x220] sm:$0xff]
      %v283 = vld [vmem:[%s169 + $0x228] sm:$0xff]
      %v284 = vld [vmem:[%s169 + $0x230] sm:$0xff]
      %v285 = vld [vmem:[%s169 + $0x238] sm:$0xff]
      %v286 = vld [vmem:[%s169 + $0x240] sm:$0xff]
      %v287 = vld [vmem:[%s169 + $0x248] sm:$0xff]
      %v288 = vld [vmem:[%s169 + $0x250] sm:$0xff]
      %v289 = vld [vmem:[%s169 + $0x258] sm:$0xff]
      %v290 = vld [vmem:[%s169 + $0x260] sm:$0xff]
      %v291 = vld [vmem:[%s169 + $0x268] sm:$0xff]
      %v292 = vld [vmem:[%s169 + $0x270] sm:$0xff]
      %v293 = vld [vmem:[%s169 + $0x278] sm:$0xff]
      %v294 = vld [vmem:[%s169 + $0x280] sm:$0xff]
      %v295 = vld [vmem:[%s169 + $0x288] sm:$0xff]
      %v296 = vld [vmem:[%s169 + $0x290] sm:$0xff]
      %v297 = vld [vmem:[%s169 + $0x298] sm:$0xff]
      %v298 = vld [vmem:[%s169 + $0x2a0] sm:$0xff]
      %v299 = vld [vmem:[%s169 + $0x2a8] sm:$0xff]
      %v300 = vld [vmem:[%s169 + $0x2b0] sm:$0xff]
      %v301 = vld [vmem:[%s169 + $0x2b8] sm:$0xff]
      %v302 = vld [vmem:[%s169 + $0x2c0] sm:$0xff]
      %v303 = vld [vmem:[%s169 + $0x2c8] sm:$0xff]
      %v304 = vld [vmem:[%s169 + $0x2d0] sm:$0xff]
      %v305 = vld [vmem:[%s169 + $0x2d8] sm:$0xff]
      %v306 = vld [vmem:[%s169 + $0x2e0] sm:$0xff]
      %v307 = vld [vmem:[%s169 + $0x2e8] sm:$0xff]
      %v308 = vld [vmem:[%s169 + $0x2f0] sm:$0xff]
      %v309 = vld [vmem:[%s169 + $0x2f8] sm:$0xff]
      %v310 = vld [vmem:[%s169 + $0x300] sm:$0xff]
      %v311 = vld [vmem:[%s169 + $0x308] sm:$0xff]
      %v312 = vld [vmem:[%s169 + $0x310] sm:$0xff]
      %v313 = vld [vmem:[%s169 + $0x318] sm:$0xff]
      %v314 = vld [vmem:[%s169 + $0x320] sm:$0xff]
      %v315 = vld [vmem:[%s169 + $0x328] sm:$0xff]
      %v316 = vld [vmem:[%s169 + $0x330] sm:$0xff]
      %v317 = vld [vmem:[%s169 + $0x338] sm:$0xff]
      %v318 = vld [vmem:[%s169 + $0x340] sm:$0xff]
      %v319 = vld [vmem:[%s169 + $0x348] sm:$0xff]
      %v320 = vld [vmem:[%s169 + $0x350] sm:$0xff]
      %v321 = vld [vmem:[%s169 + $0x358] sm:$0xff]
      %v322 = vld [vmem:[%s169 + $0x360] sm:$0xff]
      %v323 = vld [vmem:[%s169 + $0x368] sm:$0xff]
      %v324 = vld [vmem:[%s169 + $0x370] sm:$0xff]
      %v325 = vld [vmem:[%s169 + $0x378] sm:$0xff]
      %v326 = vld [vmem:[%s169 + $0x380] sm:$0xff]
      %v327 = vld [vmem:[%s169 + $0x388] sm:$0xff]
      %v328 = vld [vmem:[%s169 + $0x390] sm:$0xff]
      %v329 = vld [vmem:[%s169 + $0x398] sm:$0xff]
      %v330 = vld [vmem:[%s169 + $0x3a0] sm:$0xff]
      %v331 = vld [vmem:[%s169 + $0x3a8] sm:$0xff]
      %v332 = vld [vmem:[%s169 + $0x3b0] sm:$0xff]
      %v333 = vld [vmem:[%s169 + $0x3b8] sm:$0xff]
      %v334 = vld [vmem:[%s169 + $0x3c0] sm:$0xff]
      %v335 = vld [vmem:[%s169 + $0x3c8] sm:$0xff]
      %v336 = vld [vmem:[%s169 + $0x3d0] sm:$0xff]
      %v337 = vld [vmem:[%s169 + $0x3d8] sm:$0xff]
      %v338 = vld [vmem:[%s169 + $0x3e0] sm:$0xff]
      %v339 = vld [vmem:[%s169 + $0x3e8] sm:$0xff]
      %v340 = vld [vmem:[%s169 + $0x3f0] sm:$0xff]
      %v341 = vld [vmem:[%s169 + $0x3f8] sm:$0xff]
      %s342 = smul.u32 %s18, 512
      %s343 = scalar_lea.vmem %s1, %s342
      %v344 = vld [vmem:[%s343] sm:$0xff]
      %v345 = vld [vmem:[%s343 + $0x8] sm:$0xff]
      %v346 = vld [vmem:[%s343 + $0x10] sm:$0xff]
      %v347 = vld [vmem:[%s343 + $0x18] sm:$0xff]
      %v348 = vld [vmem:[%s343 + $0x20] sm:$0xff]
      %v349 = vld [vmem:[%s343 + $0x28] sm:$0xff]
      %v350 = vld [vmem:[%s343 + $0x30] sm:$0xff]
      %v351 = vld [vmem:[%s343 + $0x38] sm:$0xff]
      %v352 = vld [vmem:[%s343 + $0x40] sm:$0xff]
      %v353 = vld [vmem:[%s343 + $0x48] sm:$0xff]
      %v354 = vld [vmem:[%s343 + $0x50] sm:$0xff]
      %v355 = vld [vmem:[%s343 + $0x58] sm:$0xff]
      %v356 = vld [vmem:[%s343 + $0x60] sm:$0xff]
      %v357 = vld [vmem:[%s343 + $0x68] sm:$0xff]
      %v358 = vld [vmem:[%s343 + $0x70] sm:$0xff]
      %v359 = vld [vmem:[%s343 + $0x78] sm:$0xff]
      %v360 = vld [vmem:[%s343 + $0x80] sm:$0xff]
      %v361 = vld [vmem:[%s343 + $0x88] sm:$0xff]
      %v362 = vld [vmem:[%s343 + $0x90] sm:$0xff]
      %v363 = vld [vmem:[%s343 + $0x98] sm:$0xff]
      %v364 = vld [vmem:[%s343 + $0xa0] sm:$0xff]
      %v365 = vld [vmem:[%s343 + $0xa8] sm:$0xff]
      %v366 = vld [vmem:[%s343 + $0xb0] sm:$0xff]
      %v367 = vld [vmem:[%s343 + $0xb8] sm:$0xff]
      %v368 = vld [vmem:[%s343 + $0xc0] sm:$0xff]
      %v369 = vld [vmem:[%s343 + $0xc8] sm:$0xff]
      %v370 = vld [vmem:[%s343 + $0xd0] sm:$0xff]
      %v371 = vld [vmem:[%s343 + $0xd8] sm:$0xff]
      %v372 = vld [vmem:[%s343 + $0xe0] sm:$0xff]
      %v373 = vld [vmem:[%s343 + $0xe8] sm:$0xff]
      %v374 = vld [vmem:[%s343 + $0xf0] sm:$0xff]
      %v375 = vld [vmem:[%s343 + $0xf8] sm:$0xff]
      %v376 = vld [vmem:[%s343 + $0x100] sm:$0xff]
      %v377 = vld [vmem:[%s343 + $0x108] sm:$0xff]
      %v378 = vld [vmem:[%s343 + $0x110] sm:$0xff]
      %v379 = vld [vmem:[%s343 + $0x118] sm:$0xff]
      %v380 = vld [vmem:[%s343 + $0x120] sm:$0xff]
      %v381 = vld [vmem:[%s343 + $0x128] sm:$0xff]
      %v382 = vld [vmem:[%s343 + $0x130] sm:$0xff]
      %v383 = vld [vmem:[%s343 + $0x138] sm:$0xff]
      %v384 = vld [vmem:[%s343 + $0x140] sm:$0xff]
      %v385 = vld [vmem:[%s343 + $0x148] sm:$0xff]
      %v386 = vld [vmem:[%s343 + $0x150] sm:$0xff]
      %v387 = vld [vmem:[%s343 + $0x158] sm:$0xff]
      %v388 = vld [vmem:[%s343 + $0x160] sm:$0xff]
      %v389 = vld [vmem:[%s343 + $0x168] sm:$0xff]
      %v390 = vld [vmem:[%s343 + $0x170] sm:$0xff]
      %v391 = vld [vmem:[%s343 + $0x178] sm:$0xff]
      %v392 = vld [vmem:[%s343 + $0x180] sm:$0xff]
      %v393 = vld [vmem:[%s343 + $0x188] sm:$0xff]
      %v394 = vld [vmem:[%s343 + $0x190] sm:$0xff]
      %v395 = vld [vmem:[%s343 + $0x198] sm:$0xff]
      %v396 = vld [vmem:[%s343 + $0x1a0] sm:$0xff]
      %v397 = vld [vmem:[%s343 + $0x1a8] sm:$0xff]
      %v398 = vld [vmem:[%s343 + $0x1b0] sm:$0xff]
      %v399 = vld [vmem:[%s343 + $0x1b8] sm:$0xff]
      %v400 = vld [vmem:[%s343 + $0x1c0] sm:$0xff]
      %v401 = vld [vmem:[%s343 + $0x1c8] sm:$0xff]
      %v402 = vld [vmem:[%s343 + $0x1d0] sm:$0xff]
      %v403 = vld [vmem:[%s343 + $0x1d8] sm:$0xff]
      %v404 = vld [vmem:[%s343 + $0x1e0] sm:$0xff]
      %v405 = vld [vmem:[%s343 + $0x1e8] sm:$0xff]
      %v406 = vld [vmem:[%s343 + $0x1f0] sm:$0xff]
      %v407 = vld [vmem:[%s343 + $0x1f8] sm:$0xff]
      %v408 = vld [vmem:[#allocation2] sm:$0xff]
      %v409 = vld [vmem:[#allocation2 + $0x8] sm:$0xff]
      %v410 = vld [vmem:[#allocation2 + $0x10] sm:$0xff]
      %v411 = vld [vmem:[#allocation2 + $0x18] sm:$0xff]
      %v412 = vld [vmem:[#allocation2 + $0x20] sm:$0xff]
      %v413 = vld [vmem:[#allocation2 + $0x28] sm:$0xff]
      %v414 = vld [vmem:[#allocation2 + $0x30] sm:$0xff]
      %v415 = vld [vmem:[#allocation2 + $0x38] sm:$0xff]
      %v416 = vld [vmem:[#allocation2 + $0x40] sm:$0xff]
      %v417 = vld [vmem:[#allocation2 + $0x48] sm:$0xff]
      %v418 = vld [vmem:[#allocation2 + $0x50] sm:$0xff]
      %v419 = vld [vmem:[#allocation2 + $0x58] sm:$0xff]
      %v420 = vld [vmem:[#allocation2 + $0x60] sm:$0xff]
      %v421 = vld [vmem:[#allocation2 + $0x68] sm:$0xff]
      %v422 = vld [vmem:[#allocation2 + $0x70] sm:$0xff]
      %v423 = vld [vmem:[#allocation2 + $0x78] sm:$0xff]
      %v424 = vld [vmem:[#allocation2 + $0x80] sm:$0xff]
      %v425 = vld [vmem:[#allocation2 + $0x88] sm:$0xff]
      %v426 = vld [vmem:[#allocation2 + $0x90] sm:$0xff]
      %v427 = vld [vmem:[#allocation2 + $0x98] sm:$0xff]
      %v428 = vld [vmem:[#allocation2 + $0xa0] sm:$0xff]
      %v429 = vld [vmem:[#allocation2 + $0xa8] sm:$0xff]
      %v430 = vld [vmem:[#allocation2 + $0xb0] sm:$0xff]
      %v431 = vld [vmem:[#allocation2 + $0xb8] sm:$0xff]
      %v432 = vld [vmem:[#allocation2 + $0xc0] sm:$0xff]
      %v433 = vld [vmem:[#allocation2 + $0xc8] sm:$0xff]
      %v434 = vld [vmem:[#allocation2 + $0xd0] sm:$0xff]
      %v435 = vld [vmem:[#allocation2 + $0xd8] sm:$0xff]
      %v436 = vld [vmem:[#allocation2 + $0xe0] sm:$0xff]
      %v437 = vld [vmem:[#allocation2 + $0xe8] sm:$0xff]
      %v438 = vld [vmem:[#allocation2 + $0xf0] sm:$0xff]
      %v439 = vld [vmem:[#allocation2 + $0xf8] sm:$0xff]
      %440 = vmatprep.subr.mxu0 0.0
      %441 = vmatpush1.msra.mxu0 %v359
      %442 = vmatprep.subr.mxu0 0.0
      %443 = vmatpush1.msra.mxu0 %v358
      %444 = vmatprep.subr.mxu0 0.0
      %445 = vmatpush1.msra.mxu0 %v357
      %446 = vmatprep.subr.mxu0 0.0
      %447 = vmatpush1.msra.mxu0 %v356
      %448 = vmatprep.subr.mxu0 0.0
      %449 = vmatpush1.msra.mxu0 %v355
      %450 = vmatprep.subr.mxu0 0.0
      %451 = vmatpush1.msra.mxu0 %v354
      %452 = vmatprep.subr.mxu0 0.0
      %453 = vmatpush1.msra.mxu0 %v353
      %454 = vmatprep.subr.mxu0 0.0
      %455 = vmatpush1.msra.mxu0 %v352
      %456 = vmatprep.subr.mxu0 0.0
      %457 = vmatpush1.msra.mxu0 %v351
      %458 = vmatprep.subr.mxu0 0.0
      %459 = vmatpush1.msra.mxu0 %v350
      %460 = vmatprep.subr.mxu0 0.0
      %461 = vmatpush1.msra.mxu0 %v349
      %462 = vmatprep.subr.mxu0 0.0
      %463 = vmatpush1.msra.mxu0 %v348
      %464 = vmatprep.subr.mxu0 0.0
      %465 = vmatpush1.msra.mxu0 %v347
      %466 = vmatprep.subr.mxu0 0.0
      %467 = vmatpush1.msra.mxu0 %v346
      %468 = vmatprep.subr.mxu0 0.0
      %469 = vmatpush1.msra.mxu0 %v345
      %470 = vmatprep.subr.mxu0 0.0
      %471 = vmatpush1.msra.mxu0 %v344
      %472 = vmatprep.subr.mxu0 0.0
      %473 = vmatpush2.msra.mxu0 %v375
      %474 = vmatprep.subr.mxu0 0.0
      %475 = vmatpush2.msra.mxu0 %v374
      %476 = vmatprep.subr.mxu0 0.0
      %477 = vmatpush2.msra.mxu0 %v373
      %478 = vmatprep.subr.mxu0 0.0
      %479 = vmatpush2.msra.mxu0 %v372
      %480 = vmatprep.subr.mxu0 0.0
      %481 = vmatpush2.msra.mxu0 %v371
      %482 = vmatprep.subr.mxu0 0.0
      %483 = vmatpush2.msra.mxu0 %v370
      %484 = vmatprep.subr.mxu0 0.0
      %485 = vmatpush2.msra.mxu0 %v369
      %486 = vmatprep.subr.mxu0 0.0
      %487 = vmatpush2.msra.mxu0 %v368
      %488 = vmatprep.subr.mxu0 0.0
      %489 = vmatpush2.msra.mxu0 %v367
      %490 = vmatprep.subr.mxu0 0.0
      %491 = vmatpush2.msra.mxu0 %v366
      %492 = vmatprep.subr.mxu0 0.0
      %493 = vmatpush2.msra.mxu0 %v365
      %494 = vmatprep.subr.mxu0 0.0
      %495 = vmatpush2.msra.mxu0 %v364
      %496 = vmatprep.subr.mxu0 0.0
      %497 = vmatpush2.msra.mxu0 %v363
      %498 = vmatprep.subr.mxu0 0.0
      %499 = vmatpush2.msra.mxu0 %v362
      %500 = vmatprep.subr.mxu0 0.0
      %501 = vmatpush2.msra.mxu0 %v361
      %502 = vmatprep.subr.mxu0 0.0
      %503 = vmatpush2.msra.mxu0 %v360
      %504 = vmatprep.mubr.f32.mxu0 %v215
      %505 = vmatmul.mubr.f32.gmra.mxu0 %v214
      %v506 = vpop.f32.mrf.mxu0
      %v507 = vadd.f32 0.0, %v506
      %v508 = vpop.f32.mrf.mxu0
      %509 = vmatprep.mubr.f32.mxu0 %v219
      %510 = vmatmul.mubr.f32.gmra.mxu0 %v218
      %v511 = vpop.f32.mrf.mxu0
      %v512 = vadd.f32 0.0, %v511
      %v513 = vpop.f32.mrf.mxu0
      %514 = vmatprep.mubr.f32.mxu0 %v223
      %515 = vmatmul.mubr.f32.gmra.mxu0 %v222
      %v516 = vpop.f32.mrf.mxu0
      %v517 = vadd.f32 0.0, %v516
      %v518 = vpop.f32.mrf.mxu0
      %519 = vmatprep.mubr.f32.mxu0 %v227
      %520 = vmatmul.mubr.f32.gmra.mxu0 %v226
      %v521 = vpop.f32.mrf.mxu0
      %v522 = vadd.f32 0.0, %v521
      %v523 = vpop.f32.mrf.mxu0
      %524 = vmatprep.mubr.f32.mxu0 %v231
      %525 = vmatmul.mubr.f32.gmra.mxu0 %v230
      %v526 = vpop.f32.mrf.mxu0
      %v527 = vadd.f32 0.0, %v526
      %v528 = vpop.f32.mrf.mxu0
      %529 = vmatprep.mubr.f32.mxu0 %v235
      %530 = vmatmul.mubr.f32.gmra.mxu0 %v234
      %v531 = vpop.f32.mrf.mxu0
      %v532 = vadd.f32 0.0, %v531
      %v533 = vpop.f32.mrf.mxu0
      %534 = vmatprep.mubr.f32.mxu0 %v239
      %535 = vmatmul.mubr.f32.gmra.mxu0 %v238
      %v536 = vpop.f32.mrf.mxu0
      %v537 = vadd.f32 0.0, %v536
      %v538 = vpop.f32.mrf.mxu0
      %539 = vmatprep.mubr.f32.mxu0 %v243
      %540 = vmatmul.mubr.f32.gmra.mxu0 %v242
      %v541 = vpop.f32.mrf.mxu0
      %v542 = vadd.f32 0.0, %v541
      %v543 = vpop.f32.mrf.mxu0
      %544 = vmatprep.mubr.f32.mxu0 %v247
      %545 = vmatmul.mubr.f32.gmra.mxu0 %v246
      %v546 = vpop.f32.mrf.mxu0
      %v547 = vadd.f32 0.0, %v546
      %v548 = vpop.f32.mrf.mxu0
      %549 = vmatprep.mubr.f32.mxu0 %v251
      %550 = vmatmul.mubr.f32.gmra.mxu0 %v250
      %v551 = vpop.f32.mrf.mxu0
      %v552 = vadd.f32 0.0, %v551
      %v553 = vpop.f32.mrf.mxu0
      %554 = vmatprep.mubr.f32.mxu0 %v255
      %555 = vmatmul.mubr.f32.gmra.mxu0 %v254
      %v556 = vpop.f32.mrf.mxu0
      %v557 = vadd.f32 0.0, %v556
      %v558 = vpop.f32.mrf.mxu0
      %559 = vmatprep.mubr.f32.mxu0 %v259
      %560 = vmatmul.mubr.f32.gmra.mxu0 %v258
      %v561 = vpop.f32.mrf.mxu0
      %v562 = vadd.f32 0.0, %v561
      %v563 = vpop.f32.mrf.mxu0
      %564 = vmatprep.mubr.f32.mxu0 %v263
      %565 = vmatmul.mubr.f32.gmra.mxu0 %v262
      %v566 = vpop.f32.mrf.mxu0
      %v567 = vadd.f32 0.0, %v566
      %v568 = vpop.f32.mrf.mxu0
      %569 = vmatprep.mubr.f32.mxu0 %v267
      %570 = vmatmul.mubr.f32.gmra.mxu0 %v266
      %v571 = vpop.f32.mrf.mxu0
      %v572 = vadd.f32 0.0, %v571
      %v573 = vpop.f32.mrf.mxu0
      %574 = vmatprep.mubr.f32.mxu0 %v271
      %575 = vmatmul.mubr.f32.gmra.mxu0 %v270
      %v576 = vpop.f32.mrf.mxu0
      %v577 = vadd.f32 0.0, %v576
      %v578 = vpop.f32.mrf.mxu0
      %579 = vmatprep.mubr.f32.mxu0 %v275
      %580 = vmatmul.mubr.f32.gmra.mxu0 %v274
      %v581 = vpop.f32.mrf.mxu0
      %v582 = vadd.f32 0.0, %v581
      %v583 = vpop.f32.mrf.mxu0
      %584 = vmatprep.mubr.f32.mxu0 %v279
      %585 = vmatmul.mubr.f32.gmra.mxu0 %v278
      %v586 = vpop.f32.mrf.mxu0
      %v587 = vadd.f32 0.0, %v586
      %v588 = vpop.f32.mrf.mxu0
      %589 = vmatprep.mubr.f32.mxu0 %v283
      %590 = vmatmul.mubr.f32.gmra.mxu0 %v282
      %v591 = vpop.f32.mrf.mxu0
      %v592 = vadd.f32 0.0, %v591
      %v593 = vpop.f32.mrf.mxu0
      %594 = vmatprep.mubr.f32.mxu0 %v287
      %595 = vmatmul.mubr.f32.gmra.mxu0 %v286
      %v596 = vpop.f32.mrf.mxu0
      %v597 = vadd.f32 0.0, %v596
      %v598 = vpop.f32.mrf.mxu0
      %599 = vmatprep.mubr.f32.mxu0 %v291
      %600 = vmatmul.mubr.f32.gmra.mxu0 %v290
      %v601 = vpop.f32.mrf.mxu0
      %v602 = vadd.f32 0.0, %v601
      %v603 = vpop.f32.mrf.mxu0
      %604 = vmatprep.mubr.f32.mxu0 %v295
      %605 = vmatmul.mubr.f32.gmra.mxu0 %v294
      %v606 = vpop.f32.mrf.mxu0
      %v607 = vadd.f32 0.0, %v606
      %v608 = vpop.f32.mrf.mxu0
      %609 = vmatprep.mubr.f32.mxu0 %v299
      %610 = vmatmul.mubr.f32.gmra.mxu0 %v298
      %v611 = vpop.f32.mrf.mxu0
      %v612 = vadd.f32 0.0, %v611
      %v613 = vpop.f32.mrf.mxu0
      %614 = vmatprep.mubr.f32.mxu0 %v303
      %615 = vmatmul.mubr.f32.gmra.mxu0 %v302
      %v616 = vpop.f32.mrf.mxu0
      %v617 = vadd.f32 0.0, %v616
      %v618 = vpop.f32.mrf.mxu0
      %619 = vmatprep.mubr.f32.mxu0 %v307
      %620 = vmatmul.mubr.f32.gmra.mxu0 %v306
      %v621 = vpop.f32.mrf.mxu0
      %v622 = vadd.f32 0.0, %v621
      %v623 = vpop.f32.mrf.mxu0
      %624 = vmatprep.mubr.f32.mxu0 %v311
      %625 = vmatmul.mubr.f32.gmra.mxu0 %v310
      %v626 = vpop.f32.mrf.mxu0
      %v627 = vadd.f32 0.0, %v626
      %v628 = vpop.f32.mrf.mxu0
      %629 = vmatprep.mubr.f32.mxu0 %v315
      %630 = vmatmul.mubr.f32.gmra.mxu0 %v314
      %v631 = vpop.f32.mrf.mxu0
      %v632 = vadd.f32 0.0, %v631
      %v633 = vpop.f32.mrf.mxu0
      %634 = vmatprep.mubr.f32.mxu0 %v319
      %635 = vmatmul.mubr.f32.gmra.mxu0 %v318
      %v636 = vpop.f32.mrf.mxu0
      %v637 = vadd.f32 0.0, %v636
      %v638 = vpop.f32.mrf.mxu0
      %639 = vmatprep.mubr.f32.mxu0 %v323
      %640 = vmatmul.mubr.f32.gmra.mxu0 %v322
      %v641 = vpop.f32.mrf.mxu0
      %v642 = vadd.f32 0.0, %v641
      %v643 = vpop.f32.mrf.mxu0
      %644 = vmatprep.mubr.f32.mxu0 %v327
      %645 = vmatmul.mubr.f32.gmra.mxu0 %v326
      %v646 = vpop.f32.mrf.mxu0
      %v647 = vadd.f32 0.0, %v646
      %v648 = vpop.f32.mrf.mxu0
      %649 = vmatprep.mubr.f32.mxu0 %v331
      %650 = vmatmul.mubr.f32.gmra.mxu0 %v330
      %v651 = vpop.f32.mrf.mxu0
      %v652 = vadd.f32 0.0, %v651
      %v653 = vpop.f32.mrf.mxu0
      %654 = vmatprep.mubr.f32.mxu0 %v335
      %655 = vmatmul.mubr.f32.gmra.mxu0 %v334
      %v656 = vpop.f32.mrf.mxu0
      %v657 = vadd.f32 0.0, %v656
      %v658 = vpop.f32.mrf.mxu0
      %659 = vmatprep.mubr.f32.mxu0 %v339
      %660 = vmatmul.mubr.f32.gmra.mxu0 %v338
      %v661 = vpop.f32.mrf.mxu0
      %v662 = vadd.f32 0.0, %v661
      %v663 = vpop.f32.mrf.mxu0
      %664 = vdwg.mxu0
      %665 = vmatprep.subr.mxu0 0.0
      %666 = vmatpush1.msra.mxu0 %v391
      %667 = vmatprep.subr.mxu0 0.0
      %668 = vmatpush1.msra.mxu0 %v390
      %669 = vmatprep.subr.mxu0 0.0
      %670 = vmatpush1.msra.mxu0 %v389
      %671 = vmatprep.subr.mxu0 0.0
      %672 = vmatpush1.msra.mxu0 %v388
      %673 = vmatprep.subr.mxu0 0.0
      %674 = vmatpush1.msra.mxu0 %v387
      %675 = vmatprep.subr.mxu0 0.0
      %676 = vmatpush1.msra.mxu0 %v386
      %677 = vmatprep.subr.mxu0 0.0
      %678 = vmatpush1.msra.mxu0 %v385
      %679 = vmatprep.subr.mxu0 0.0
      %680 = vmatpush1.msra.mxu0 %v384
      %681 = vmatprep.subr.mxu0 0.0
      %682 = vmatpush1.msra.mxu0 %v383
      %683 = vmatprep.subr.mxu0 0.0
      %684 = vmatpush1.msra.mxu0 %v382
      %685 = vmatprep.subr.mxu0 0.0
      %686 = vmatpush1.msra.mxu0 %v381
      %687 = vmatprep.subr.mxu0 0.0
      %688 = vmatpush1.msra.mxu0 %v380
      %689 = vmatprep.subr.mxu0 0.0
      %690 = vmatpush1.msra.mxu0 %v379
      %691 = vmatprep.subr.mxu0 0.0
      %692 = vmatpush1.msra.mxu0 %v378
      %693 = vmatprep.subr.mxu0 0.0
      %694 = vmatpush1.msra.mxu0 %v377
      %695 = vmatprep.subr.mxu0 0.0
      %696 = vmatpush1.msra.mxu0 %v376
      %697 = vmatprep.subr.mxu0 0.0
      %698 = vmatpush2.msra.mxu0 %v407
      %699 = vmatprep.subr.mxu0 0.0
      %700 = vmatpush2.msra.mxu0 %v406
      %701 = vmatprep.subr.mxu0 0.0
      %702 = vmatpush2.msra.mxu0 %v405
      %703 = vmatprep.subr.mxu0 0.0
      %704 = vmatpush2.msra.mxu0 %v404
      %705 = vmatprep.subr.mxu0 0.0
      %706 = vmatpush2.msra.mxu0 %v403
      %707 = vmatprep.subr.mxu0 0.0
      %708 = vmatpush2.msra.mxu0 %v402
      %709 = vmatprep.subr.mxu0 0.0
      %710 = vmatpush2.msra.mxu0 %v401
      %711 = vmatprep.subr.mxu0 0.0
      %712 = vmatpush2.msra.mxu0 %v400
      %713 = vmatprep.subr.mxu0 0.0
      %714 = vmatpush2.msra.mxu0 %v399
      %715 = vmatprep.subr.mxu0 0.0
      %716 = vmatpush2.msra.mxu0 %v398
      %717 = vmatprep.subr.mxu0 0.0
      %718 = vmatpush2.msra.mxu0 %v397
      %719 = vmatprep.subr.mxu0 0.0
      %720 = vmatpush2.msra.mxu0 %v396
      %721 = vmatprep.subr.mxu0 0.0
      %722 = vmatpush2.msra.mxu0 %v395
      %723 = vmatprep.subr.mxu0 0.0
      %724 = vmatpush2.msra.mxu0 %v394
      %725 = vmatprep.subr.mxu0 0.0
      %726 = vmatpush2.msra.mxu0 %v393
      %727 = vmatprep.subr.mxu0 0.0
      %728 = vmatpush2.msra.mxu0 %v392
      %729 = vmatprep.mubr.f32.mxu0 %v217
      %730 = vmatmul.mubr.f32.gmra.mxu0 %v216
      %v731 = vpop.f32.mrf.mxu0
      %v732 = vadd.f32 %v507, %v731
      %v733 = vpop.f32.mrf.mxu0
      %734 = vmatprep.mubr.f32.mxu0 %v221
      %735 = vmatmul.mubr.f32.gmra.mxu0 %v220
      %v736 = vpop.f32.mrf.mxu0
      %v737 = vadd.f32 %v512, %v736
      %v738 = vpop.f32.mrf.mxu0
      %739 = vmatprep.mubr.f32.mxu0 %v225
      %740 = vmatmul.mubr.f32.gmra.mxu0 %v224
      %v741 = vpop.f32.mrf.mxu0
      %v742 = vadd.f32 %v517, %v741
      %v743 = vpop.f32.mrf.mxu0
      %744 = vmatprep.mubr.f32.mxu0 %v229
      %745 = vmatmul.mubr.f32.gmra.mxu0 %v228
      %v746 = vpop.f32.mrf.mxu0
      %v747 = vadd.f32 %v522, %v746
      %v748 = vpop.f32.mrf.mxu0
      %749 = vmatprep.mubr.f32.mxu0 %v233
      %750 = vmatmul.mubr.f32.gmra.mxu0 %v232
      %v751 = vpop.f32.mrf.mxu0
      %v752 = vadd.f32 %v527, %v751
      %v753 = vpop.f32.mrf.mxu0
      %754 = vmatprep.mubr.f32.mxu0 %v237
      %755 = vmatmul.mubr.f32.gmra.mxu0 %v236
      %v756 = vpop.f32.mrf.mxu0
      %v757 = vadd.f32 %v532, %v756
      %v758 = vpop.f32.mrf.mxu0
      %759 = vmatprep.mubr.f32.mxu0 %v241
      %760 = vmatmul.mubr.f32.gmra.mxu0 %v240
      %v761 = vpop.f32.mrf.mxu0
      %v762 = vadd.f32 %v537, %v761
      %v763 = vpop.f32.mrf.mxu0
      %764 = vmatprep.mubr.f32.mxu0 %v245
      %765 = vmatmul.mubr.f32.gmra.mxu0 %v244
      %v766 = vpop.f32.mrf.mxu0
      %v767 = vadd.f32 %v542, %v766
      %v768 = vpop.f32.mrf.mxu0
      %769 = vmatprep.mubr.f32.mxu0 %v249
      %770 = vmatmul.mubr.f32.gmra.mxu0 %v248
      %v771 = vpop.f32.mrf.mxu0
      %v772 = vadd.f32 %v547, %v771
      %v773 = vpop.f32.mrf.mxu0
      %774 = vmatprep.mubr.f32.mxu0 %v253
      %775 = vmatmul.mubr.f32.gmra.mxu0 %v252
      %v776 = vpop.f32.mrf.mxu0
      %v777 = vadd.f32 %v552, %v776
      %v778 = vpop.f32.mrf.mxu0
      %779 = vmatprep.mubr.f32.mxu0 %v257
      %780 = vmatmul.mubr.f32.gmra.mxu0 %v256
      %v781 = vpop.f32.mrf.mxu0
      %v782 = vadd.f32 %v557, %v781
      %v783 = vpop.f32.mrf.mxu0
      %784 = vmatprep.mubr.f32.mxu0 %v261
      %785 = vmatmul.mubr.f32.gmra.mxu0 %v260
      %v786 = vpop.f32.mrf.mxu0
      %v787 = vadd.f32 %v562, %v786
      %v788 = vpop.f32.mrf.mxu0
      %789 = vmatprep.mubr.f32.mxu0 %v265
      %790 = vmatmul.mubr.f32.gmra.mxu0 %v264
      %v791 = vpop.f32.mrf.mxu0
      %v792 = vadd.f32 %v567, %v791
      %v793 = vpop.f32.mrf.mxu0
      %794 = vmatprep.mubr.f32.mxu0 %v269
      %795 = vmatmul.mubr.f32.gmra.mxu0 %v268
      %v796 = vpop.f32.mrf.mxu0
      %v797 = vadd.f32 %v572, %v796
      %v798 = vpop.f32.mrf.mxu0
      %799 = vmatprep.mubr.f32.mxu0 %v273
      %800 = vmatmul.mubr.f32.gmra.mxu0 %v272
      %v801 = vpop.f32.mrf.mxu0
      %v802 = vadd.f32 %v577, %v801
      %v803 = vpop.f32.mrf.mxu0
      %804 = vmatprep.mubr.f32.mxu0 %v277
      %805 = vmatmul.mubr.f32.gmra.mxu0 %v276
      %v806 = vpop.f32.mrf.mxu0
      %v807 = vadd.f32 %v582, %v806
      %v808 = vpop.f32.mrf.mxu0
      %809 = vmatprep.mubr.f32.mxu0 %v281
      %810 = vmatmul.mubr.f32.gmra.mxu0 %v280
      %v811 = vpop.f32.mrf.mxu0
      %v812 = vadd.f32 %v587, %v811
      %v813 = vpop.f32.mrf.mxu0
      %814 = vmatprep.mubr.f32.mxu0 %v285
      %815 = vmatmul.mubr.f32.gmra.mxu0 %v284
      %v816 = vpop.f32.mrf.mxu0
      %v817 = vadd.f32 %v592, %v816
      %v818 = vpop.f32.mrf.mxu0
      %819 = vmatprep.mubr.f32.mxu0 %v289
      %820 = vmatmul.mubr.f32.gmra.mxu0 %v288
      %v821 = vpop.f32.mrf.mxu0
      %v822 = vadd.f32 %v597, %v821
      %v823 = vpop.f32.mrf.mxu0
      %824 = vmatprep.mubr.f32.mxu0 %v293
      %825 = vmatmul.mubr.f32.gmra.mxu0 %v292
      %v826 = vpop.f32.mrf.mxu0
      %v827 = vadd.f32 %v602, %v826
      %v828 = vpop.f32.mrf.mxu0
      %829 = vmatprep.mubr.f32.mxu0 %v297
      %830 = vmatmul.mubr.f32.gmra.mxu0 %v296
      %v831 = vpop.f32.mrf.mxu0
      %v832 = vadd.f32 %v607, %v831
      %v833 = vpop.f32.mrf.mxu0
      %834 = vmatprep.mubr.f32.mxu0 %v301
      %835 = vmatmul.mubr.f32.gmra.mxu0 %v300
      %v836 = vpop.f32.mrf.mxu0
      %v837 = vadd.f32 %v612, %v836
      %v838 = vpop.f32.mrf.mxu0
      %839 = vmatprep.mubr.f32.mxu0 %v305
      %840 = vmatmul.mubr.f32.gmra.mxu0 %v304
      %v841 = vpop.f32.mrf.mxu0
      %v842 = vadd.f32 %v617, %v841
      %v843 = vpop.f32.mrf.mxu0
      %844 = vmatprep.mubr.f32.mxu0 %v309
      %845 = vmatmul.mubr.f32.gmra.mxu0 %v308
      %v846 = vpop.f32.mrf.mxu0
      %v847 = vadd.f32 %v622, %v846
      %v848 = vpop.f32.mrf.mxu0
      %849 = vmatprep.mubr.f32.mxu0 %v313
      %850 = vmatmul.mubr.f32.gmra.mxu0 %v312
      %v851 = vpop.f32.mrf.mxu0
      %v852 = vadd.f32 %v627, %v851
      %v853 = vpop.f32.mrf.mxu0
      %854 = vmatprep.mubr.f32.mxu0 %v317
      %855 = vmatmul.mubr.f32.gmra.mxu0 %v316
      %v856 = vpop.f32.mrf.mxu0
      %v857 = vadd.f32 %v632, %v856
      %v858 = vpop.f32.mrf.mxu0
      %859 = vmatprep.mubr.f32.mxu0 %v321
      %860 = vmatmul.mubr.f32.gmra.mxu0 %v320
      %v861 = vpop.f32.mrf.mxu0
      %v862 = vadd.f32 %v637, %v861
      %v863 = vpop.f32.mrf.mxu0
      %864 = vmatprep.mubr.f32.mxu0 %v325
      %865 = vmatmul.mubr.f32.gmra.mxu0 %v324
      %v866 = vpop.f32.mrf.mxu0
      %v867 = vadd.f32 %v642, %v866
      %v868 = vpop.f32.mrf.mxu0
      %869 = vmatprep.mubr.f32.mxu0 %v329
      %870 = vmatmul.mubr.f32.gmra.mxu0 %v328
      %v871 = vpop.f32.mrf.mxu0
      %v872 = vadd.f32 %v647, %v871
      %v873 = vpop.f32.mrf.mxu0
      %874 = vmatprep.mubr.f32.mxu0 %v333
      %875 = vmatmul.mubr.f32.gmra.mxu0 %v332
      %v876 = vpop.f32.mrf.mxu0
      %v877 = vadd.f32 %v652, %v876
      %v878 = vpop.f32.mrf.mxu0
      %879 = vmatprep.mubr.f32.mxu0 %v337
      %880 = vmatmul.mubr.f32.gmra.mxu0 %v336
      %v881 = vpop.f32.mrf.mxu0
      %v882 = vadd.f32 %v657, %v881
      %v883 = vpop.f32.mrf.mxu0
      %884 = vmatprep.mubr.f32.mxu0 %v341
      %885 = vmatmul.mubr.f32.gmra.mxu0 %v340
      %v886 = vpop.f32.mrf.mxu0
      %v887 = vadd.f32 %v662, %v886
      %v888 = vpop.f32.mrf.mxu0
      %889 = vdwg.mxu0
      %v890 = vadd.f32 %v408, %v732
      %v891 = vadd.f32 %v409, %v737
      %v892 = vadd.f32 %v410, %v742
      %v893 = vadd.f32 %v411, %v747
      %v894 = vadd.f32 %v412, %v752
      %v895 = vadd.f32 %v413, %v757
      %v896 = vadd.f32 %v414, %v762
      %v897 = vadd.f32 %v415, %v767
      %v898 = vadd.f32 %v416, %v772
      %v899 = vadd.f32 %v417, %v777
      %v900 = vadd.f32 %v418, %v782
      %v901 = vadd.f32 %v419, %v787
      %v902 = vadd.f32 %v420, %v792
      %v903 = vadd.f32 %v421, %v797
      %v904 = vadd.f32 %v422, %v802
      %v905 = vadd.f32 %v423, %v807
      %v906 = vadd.f32 %v424, %v812
      %v907 = vadd.f32 %v425, %v817
      %v908 = vadd.f32 %v426, %v822
      %v909 = vadd.f32 %v427, %v827
      %v910 = vadd.f32 %v428, %v832
      %v911 = vadd.f32 %v429, %v837
      %v912 = vadd.f32 %v430, %v842
      %v913 = vadd.f32 %v431, %v847
      %v914 = vadd.f32 %v432, %v852
      %v915 = vadd.f32 %v433, %v857
      %v916 = vadd.f32 %v434, %v862
      %v917 = vadd.f32 %v435, %v867
      %v918 = vadd.f32 %v436, %v872
      %v919 = vadd.f32 %v437, %v877
      %v920 = vadd.f32 %v438, %v882
      %v921 = vadd.f32 %v439, %v887
      %922 = vst [vmem:[#allocation2] sm:$0xff] %v890
      %923 = vst [vmem:[#allocation2 + $0x8] sm:$0xff] %v891
      %924 = vst [vmem:[#allocation2 + $0x10] sm:$0xff] %v892
      %925 = vst [vmem:[#allocation2 + $0x18] sm:$0xff] %v893
      %926 = vst [vmem:[#allocation2 + $0x20] sm:$0xff] %v894
      %927 = vst [vmem:[#allocation2 + $0x28] sm:$0xff] %v895
      %928 = vst [vmem:[#allocation2 + $0x30] sm:$0xff] %v896
      %929 = vst [vmem:[#allocation2 + $0x38] sm:$0xff] %v897
      %930 = vst [vmem:[#allocation2 + $0x40] sm:$0xff] %v898
      %931 = vst [vmem:[#allocation2 + $0x48] sm:$0xff] %v899
      %932 = vst [vmem:[#allocation2 + $0x50] sm:$0xff] %v900
      %933 = vst [vmem:[#allocation2 + $0x58] sm:$0xff] %v901
      %934 = vst [vmem:[#allocation2 + $0x60] sm:$0xff] %v902
      %935 = vst [vmem:[#allocation2 + $0x68] sm:$0xff] %v903
      %936 = vst [vmem:[#allocation2 + $0x70] sm:$0xff] %v904
      %937 = vst [vmem:[#allocation2 + $0x78] sm:$0xff] %v905
      %938 = vst [vmem:[#allocation2 + $0x80] sm:$0xff] %v906
      %939 = vst [vmem:[#allocation2 + $0x88] sm:$0xff] %v907
      %940 = vst [vmem:[#allocation2 + $0x90] sm:$0xff] %v908
      %941 = vst [vmem:[#allocation2 + $0x98] sm:$0xff] %v909
      %942 = vst [vmem:[#allocation2 + $0xa0] sm:$0xff] %v910
      %943 = vst [vmem:[#allocation2 + $0xa8] sm:$0xff] %v911
      %944 = vst [vmem:[#allocation2 + $0xb0] sm:$0xff] %v912
      %945 = vst [vmem:[#allocation2 + $0xb8] sm:$0xff] %v913
      %946 = vst [vmem:[#allocation2 + $0xc0] sm:$0xff] %v914
      %947 = vst [vmem:[#allocation2 + $0xc8] sm:$0xff] %v915
      %948 = vst [vmem:[#allocation2 + $0xd0] sm:$0xff] %v916
      %949 = vst [vmem:[#allocation2 + $0xd8] sm:$0xff] %v917
      %950 = vst [vmem:[#allocation2 + $0xe0] sm:$0xff] %v918
      %951 = vst [vmem:[#allocation2 + $0xe8] sm:$0xff] %v919
      %952 = vst [vmem:[#allocation2 + $0xf0] sm:$0xff] %v920
      %953 = vst [vmem:[#allocation2 + $0xf8] sm:$0xff] %v921
      // Predicated region
      $region33: #{lpa_forward.3} parent=27 // pred_check
        %p954 = pneg %p178
      $region34: #{lpa_forward.3} parent=27 // pred_check_branch
        %956 = sbr.rel (%p954) target = $region36
      $region35: #{lpa_forward.3} parent=27 // pred_region
        %v957 = vld [vmem:[#allocation2] sm:$0xff]
        %v958 = vld [vmem:[#allocation2 + $0x8] sm:$0xff]
        %v959 = vld [vmem:[#allocation2 + $0x10] sm:$0xff]
        %v960 = vld [vmem:[#allocation2 + $0x18] sm:$0xff]
        %v961 = vld [vmem:[#allocation2 + $0x20] sm:$0xff]
        %v962 = vld [vmem:[#allocation2 + $0x28] sm:$0xff]
        %v963 = vld [vmem:[#allocation2 + $0x30] sm:$0xff]
        %v964 = vld [vmem:[#allocation2 + $0x38] sm:$0xff]
        %v965 = vld [vmem:[#allocation2 + $0x40] sm:$0xff]
        %v966 = vld [vmem:[#allocation2 + $0x48] sm:$0xff]
        %v967 = vld [vmem:[#allocation2 + $0x50] sm:$0xff]
        %v968 = vld [vmem:[#allocation2 + $0x58] sm:$0xff]
        %v969 = vld [vmem:[#allocation2 + $0x60] sm:$0xff]
        %v970 = vld [vmem:[#allocation2 + $0x68] sm:$0xff]
        %v971 = vld [vmem:[#allocation2 + $0x70] sm:$0xff]
        %v972 = vld [vmem:[#allocation2 + $0x78] sm:$0xff]
        %v973 = vld [vmem:[#allocation2 + $0x80] sm:$0xff]
        %v974 = vld [vmem:[#allocation2 + $0x88] sm:$0xff]
        %v975 = vld [vmem:[#allocation2 + $0x90] sm:$0xff]
        %v976 = vld [vmem:[#allocation2 + $0x98] sm:$0xff]
        %v977 = vld [vmem:[#allocation2 + $0xa0] sm:$0xff]
        %v978 = vld [vmem:[#allocation2 + $0xa8] sm:$0xff]
        %v979 = vld [vmem:[#allocation2 + $0xb0] sm:$0xff]
        %v980 = vld [vmem:[#allocation2 + $0xb8] sm:$0xff]
        %v981 = vld [vmem:[#allocation2 + $0xc0] sm:$0xff]
        %v982 = vld [vmem:[#allocation2 + $0xc8] sm:$0xff]
        %v983 = vld [vmem:[#allocation2 + $0xd0] sm:$0xff]
        %v984 = vld [vmem:[#allocation2 + $0xd8] sm:$0xff]
        %v985 = vld [vmem:[#allocation2 + $0xe0] sm:$0xff]
        %v986 = vld [vmem:[#allocation2 + $0xe8] sm:$0xff]
        %v987 = vld [vmem:[#allocation2 + $0xf0] sm:$0xff]
        %v988 = vld [vmem:[#allocation2 + $0xf8] sm:$0xff]
        %989 = vst [vmem:[%s176] sm:$0xff] %v957
        %990 = vst [vmem:[%s176 + $0x8] sm:$0xff] %v958
        %991 = vst [vmem:[%s176 + $0x10] sm:$0xff] %v959
        %992 = vst [vmem:[%s176 + $0x18] sm:$0xff] %v960
        %993 = vst [vmem:[%s176 + $0x20] sm:$0xff] %v961
        %994 = vst [vmem:[%s176 + $0x28] sm:$0xff] %v962
        %995 = vst [vmem:[%s176 + $0x30] sm:$0xff] %v963
        %996 = vst [vmem:[%s176 + $0x38] sm:$0xff] %v964
        %997 = vst [vmem:[%s176 + $0x40] sm:$0xff] %v965
        %998 = vst [vmem:[%s176 + $0x48] sm:$0xff] %v966
        %999 = vst [vmem:[%s176 + $0x50] sm:$0xff] %v967
        %1000 = vst [vmem:[%s176 + $0x58] sm:$0xff] %v968
        %1001 = vst [vmem:[%s176 + $0x60] sm:$0xff] %v969
        %1002 = vst [vmem:[%s176 + $0x68] sm:$0xff] %v970
        %1003 = vst [vmem:[%s176 + $0x70] sm:$0xff] %v971
        %1004 = vst [vmem:[%s176 + $0x78] sm:$0xff] %v972
        %1005 = vst [vmem:[%s176 + $0x80] sm:$0xff] %v973
        %1006 = vst [vmem:[%s176 + $0x88] sm:$0xff] %v974
        %1007 = vst [vmem:[%s176 + $0x90] sm:$0xff] %v975
        %1008 = vst [vmem:[%s176 + $0x98] sm:$0xff] %v976
        %1009 = vst [vmem:[%s176 + $0xa0] sm:$0xff] %v977
        %1010 = vst [vmem:[%s176 + $0xa8] sm:$0xff] %v978
        %1011 = vst [vmem:[%s176 + $0xb0] sm:$0xff] %v979
        %1012 = vst [vmem:[%s176 + $0xb8] sm:$0xff] %v980
        %1013 = vst [vmem:[%s176 + $0xc0] sm:$0xff] %v981
        %1014 = vst [vmem:[%s176 + $0xc8] sm:$0xff] %v982
        %1015 = vst [vmem:[%s176 + $0xd0] sm:$0xff] %v983
        %1016 = vst [vmem:[%s176 + $0xd8] sm:$0xff] %v984
        %1017 = vst [vmem:[%s176 + $0xe0] sm:$0xff] %v985
        %1018 = vst [vmem:[%s176 + $0xe8] sm:$0xff] %v986
        %1019 = vst [vmem:[%s176 + $0xf0] sm:$0xff] %v987
        %1020 = vst [vmem:[%s176 + $0xf8] sm:$0xff] %v988
      $region36: #{lpa_forward.3} parent=27 // pred_fallthru
        _
      %s1021 = smul.u32 32, %s17
      %p1022 = scmp.lt.s32.totalorder %s1021, 63
      %s1023 = scalar_select %p1022, %s1021, 63
      %s1024 = smul.addr %s1023, 8
      %s1025 = scalar_lea.vmem %s2, %s1024
      // Predicated region
      $region37: #{lpa_forward.3} parent=27 // pred_check
        %p1026 = pneg %p92
      $region38: #{lpa_forward.3} parent=27 // pred_check_branch
        %1028 = sbr.rel (%p1026) target = $region40
      $region39: #{lpa_forward.3} parent=27 // pred_region
        %s1029 = smul.u32 32, %s17
      $region40: #{lpa_forward.3} parent=27 // pred_fallthru
        _
    $region28: #{lpa_forward.3} parent=5 // pred_fallthru
      _
    %p1030 = scmp.le.s32.totalorder 2, %s8
    // Predicated region
    $region41: #{lpa_forward.3} parent=5 // pred_check
      %p1031 = pneg %p1030
    $region42: #{lpa_forward.3} parent=5 // pred_check_branch
      %1033 = sbr.rel (%p1031) target = $region44
    $region43: #{lpa_forward.3} parent=5 // pred_region
      %s1034 = ssub.s32 %s8, 2
      // Predicated region
      $region45: #{lpa_forward.3} parent=43 // pred_check
        %p1035 = pneg %p98
      $region46: #{lpa_forward.3} parent=43 // pred_check_branch
        %1037 = sbr.rel (%p1035) target = $region48
      $region47: #{lpa_forward.3} parent=43 // pred_region
        %s1038 = smul.u32 32, %s19
        %p1039 = scmp.lt.s32.totalorder %s1038, 63
        %s1040 = scalar_select %p1039, %s1038, 63
        %s1041 = smul.addr %s1040, 8
        %s1042 = scalar_lea.vmem %s2, %s1041
      $region48: #{lpa_forward.3} parent=43 // pred_fallthru
        _
    $region44: #{lpa_forward.3} parent=5 // pred_fallthru
      _
  $region6: #{lpa_forward.3} parent=0 // loop_footer
    %s12 = sadd.s32 1, %s8
  $region7: #{lpa_forward.3} parent=0 // loop_footer_branch
    %7 = sbr.rel target = $region3
  $region8: #{lpa_forward.3} parent=0 // loop_exit
    _

</llo_original>
